<compile_context>
chip_gen: v7x
topology: tpu7x:2x2x1
jax: 0.10.0
libtpu: 0.0.40
codegen_flags: <defaults>
</compile_context>

<pallas_src>
import jax
import jax.numpy as jnp
from jax.experimental import pallas as pl
from jax.experimental.pallas import tpu as pltpu


def encoder_gru_kernel(x_ref, wih_ref, whh_ref, bi_ref, bhn_ref, h_out_ref):
    """Single-invocation GRU: hoisted input projection + unrolled recurrence."""
    Bp, H = h_out_ref.shape
    T = x_ref.shape[0] // Bp

    # ---- Hoisted input projection: one batched matmul over ALL timesteps. ----
    # (T*Bp, E) @ (E, 3H) -> (T*Bp, 3H); the input biases for all gates and the
    # hidden biases for r/z are folded in here, outside the serial loop.
    gi = jnp.dot(x_ref[...], wih_ref[...],
                 preferred_element_type=jnp.float32) + bi_ref[...]

    # Recurrent weights / bias stay VMEM- and vreg-resident across the loop.
    whh = whh_ref[...]          # (H, 3H), columns [r | z | n]
    bhn = bhn_ref[...]          # (1, H) — only b_hh's n-gate part stays in-loop

    h = jnp.zeros((Bp, H), jnp.float32)
    # Short fixed trip count -> static Python unroll; `gi` stays a traced value
    # (~a handful of vregs at these shapes), so each step's gate inputs are
    # static lane/sublane slices — no VMEM scratch stores + per-step masked
    # loads as in the previous version.
    # TODO(synk): for long sequences switch to lax.fori_loop(unroll=4/8) plus a
    # T-chunked ('arbitrary') grid axis with an explicit vmem_limit_bytes so
    # code size, live ranges and VMEM residency stay bounded (64 MiB on v7x).
    for t in range(T):
        gi_t = gi[t * Bp:(t + 1) * Bp, :]                         # (Bp, 3H)
        # Single fused recurrent matmul: 1 MXU push/pop per step instead of 3.
        gh = jnp.dot(h, whh, preferred_element_type=jnp.float32)  # (Bp, 3H)
        rz = jax.nn.sigmoid(gi_t[:, 0:2 * H] + gh[:, 0:2 * H])    # fused r|z
        r = rz[:, 0:H]
        z = rz[:, H:2 * H]
        n = jnp.tanh(gi_t[:, 2 * H:3 * H] + r * (gh[:, 2 * H:3 * H] + bhn))
        h = (1.0 - z) * n + z * h

    h_out_ref[...] = h          # single final store


def encoder_gru_pallas(x_emb, w_ih, w_hh, b_ih, b_hh):
    """x_emb: (T, B, E) f32; PyTorch-layout GRU params (3H,E),(3H,H),(3H,),(3H,).
    Returns the final hidden state (1, B, H) (nn.GRU's `hidden` output)."""
    T, B, E = x_emb.shape
    H = w_hh.shape[1]

    # Pad the batch to the 8-sublane granule; padded rows are independent and
    # are sliced off at the end.
    # TODO(synk): with many concurrent sequences, stack them here so the
    # effective batch approaches the MXU row count (128 on v5e, 256 on
    # v6e/v7x) before padding — at B=2 the kernel is latency-bound.
    Bp = max(8, -(-B // 8) * 8)
    x = jnp.pad(x_emb.astype(jnp.float32), ((0, 0), (0, Bp - B), (0, 0)))
    x2d = x.reshape(T * Bp, E)

    # Keep W_hh^T as ONE (H, 3H) operand so the per-step recurrent matmul is a
    # single fused (Bp,H)@(H,3H) MXU op.
    wih_t = jnp.transpose(w_ih).astype(jnp.float32)           # (E, 3H), [r|z|n]
    whh_t = jnp.transpose(w_hh).astype(jnp.float32)           # (H, 3H), [r|z|n]

    # Fold all input biases + the r/z hidden biases into the hoisted projection;
    # only b_hh[n] must remain in-loop (it sits inside the r * (...) term).
    bi = jnp.concatenate([
        b_ih[0:H] + b_hh[0:H],
        b_ih[H:2 * H] + b_hh[H:2 * H],
        b_ih[2 * H:3 * H],
    ]).reshape(1, 3 * H).astype(jnp.float32)
    bhn = b_hh[2 * H:3 * H].reshape(1, H).astype(jnp.float32)

    # TODO(synk): for production sizes (H multiple of 128, long T, big batch):
    #   * cast x2d / wih_t / whh_t to bf16 for the matmuls (keep f32 accum +
    #     f32 gate math) — needed to hit v6e/v7x MXU peak and halves DMA bytes,
    #   * chunk the sequence over an 'arbitrary' T grid axis (restores
    #     DMA/compute overlap) and set vmem_limit_bytes for v7x's 64 MiB VMEM,
    #   * add a leading 'parallel' batch grid axis so v7x's 2 TensorCores split
    #     the batch (no-op on v5e/v6e),
    #   * prefer lane-dense (multiple-of-128) H so gate ops / the final store
    #     are unmasked.
    h_full = pl.pallas_call(
        encoder_gru_kernel,
        out_shape=jax.ShapeDtypeStruct((Bp, H), jnp.float32),
        grid_spec=pltpu.PrefetchScalarGridSpec(
            num_scalar_prefetch=0,
            grid=(1,),
            in_specs=[
                pl.BlockSpec((T * Bp, E), lambda i: (0, 0)),    # x, all timesteps
                pl.BlockSpec((E, 3 * H), lambda i: (0, 0)),     # W_ih^T
                pl.BlockSpec((H, 3 * H), lambda i: (0, 0)),     # W_hh^T (fused)
                pl.BlockSpec((1, 3 * H), lambda i: (0, 0)),     # fused proj bias
                pl.BlockSpec((1, H), lambda i: (0, 0)),         # b_hh[n]
            ],
            out_specs=pl.BlockSpec((Bp, H), lambda i: (0, 0)),
        ),
        compiler_params=pltpu.CompilerParams(
            dimension_semantics=("arbitrary",)),
    )(x2d, wih_t, whh_t, bi, bhn)

    return h_full[:B][None]                                     # (1, B, H)


def encoder_forward(tokens, emb_table, w_ih, w_hh, b_ih, b_hh):
    """tokens: (T, B) int32 -> hidden (1, B, H)."""
    # Embedding lookup (+ eval-mode dropout == identity) is XLA glue.
    # TODO(synk): for production, fuse the gather into the kernel via
    # scalar-prefetched token ids (pl.Element row-gather / manual DMA gather).
    x = jnp.take(emb_table, tokens, axis=0).astype(jnp.float32)  # (T, B, E)
    return encoder_gru_pallas(x, w_ih, w_hh, b_ih, b_hh)


def encoder_reference(tokens, emb_table, w_ih, w_hh, b_ih, b_hh):
    """Pure-JAX reference implementing PyTorch nn.GRU semantics."""
    x = jnp.take(emb_table, tokens, axis=0).astype(jnp.float32)
    T, B, E = x.shape
    H = w_hh.shape[1]
    h0 = jnp.zeros((B, H), jnp.float32)

    def step(h, x_t):
        gi = x_t @ w_ih.T + b_ih
        gh = h @ w_hh.T + b_hh
        i_r, i_z, i_n = gi[:, :H], gi[:, H:2 * H], gi[:, 2 * H:]
        h_r, h_z, h_n = gh[:, :H], gh[:, H:2 * H], gh[:, 2 * H:]
        r = jax.nn.sigmoid(i_r + h_r)
        z = jax.nn.sigmoid(i_z + h_z)
        n = jnp.tanh(i_n + r * h_n)
        h_new = (1.0 - z) * n + z * h
        return h_new, None

    h_final, _ = jax.lax.scan(step, h0, x)
    return h_final[None]  # (1, B, H)


if __name__ == "__main__":
    # Small shapes consistent with the module's forward.
    VOCAB = 50
    EMB = 16          # embedding_dim
    HIDDEN = 32       # hidden_size
    SEQ = 8           # seq_len
    BATCH = 2

    key = jax.random.PRNGKey(0)
    k_tok, k_emb, k_wih, k_whh, k_bih, k_bhh = jax.random.split(key, 6)

    tokens = jax.random.randint(k_tok, (SEQ, BATCH), 0, VOCAB, dtype=jnp.int32)

    # Deterministic parameter init (PyTorch-like uniform(-1/sqrt(H), 1/sqrt(H))).
    emb_table = jax.random.normal(k_emb, (VOCAB, EMB), jnp.float32)
    bound = 1.0 / (HIDDEN ** 0.5)
    w_ih = jax.random.uniform(k_wih, (3 * HIDDEN, EMB), jnp.float32, -bound, bound)
    w_hh = jax.random.uniform(k_whh, (3 * HIDDEN, HIDDEN), jnp.float32, -bound, bound)
    b_ih = jax.random.uniform(k_bih, (3 * HIDDEN,), jnp.float32, -bound, bound)
    b_hh = jax.random.uniform(k_bhh, (3 * HIDDEN,), jnp.float32, -bound, bound)

    hidden = encoder_forward(tokens, emb_table, w_ih, w_hh, b_ih, b_hh)
    hidden = jax.block_until_ready(hidden)

    ref = jax.block_until_ready(
        encoder_reference(tokens, emb_table, w_ih, w_hh, b_ih, b_hh))

    assert hidden.shape == (1, BATCH, HIDDEN), hidden.shape
    assert jnp.allclose(hidden, ref, atol=1e-5, rtol=1e-5), "mismatch vs reference"

    print("KERNEL_OK")
</pallas_src>

<mosaic_0001>
module attributes {stable_mosaic.version = 11 : i64} {
  func.func @encoder_gru_kernel(%arg0: i32, %arg1: memref<64x16xf32, #tpu.memory_space<vmem>>, %arg2: memref<16x96xf32, #tpu.memory_space<vmem>>, %arg3: memref<32x96xf32, #tpu.memory_space<vmem>>, %arg4: memref<1x96xf32, #tpu.memory_space<vmem>>, %arg5: memref<1x32xf32, #tpu.memory_space<vmem>>, %arg6: memref<8x32xf32, #tpu.memory_space<vmem>>) attributes {dimension_semantics = [#tpu.dimension_semantics<arbitrary>], iteration_bounds = array<i64: 1>, scalar_prefetch = 0 : i64, scratch_operands = 0 : i64, tpu.core_type = #tpu.core_type<tc>, window_params = [{pipeline_mode = #tpu.pipeline_mode<synchronous>, transform_indices = @transform_0, window_bounds = array<i64: 64, 16>}, {pipeline_mode = #tpu.pipeline_mode<synchronous>, transform_indices = @transform_1, window_bounds = array<i64: 16, 96>}, {pipeline_mode = #tpu.pipeline_mode<synchronous>, transform_indices = @transform_2, window_bounds = array<i64: 32, 96>}, {pipeline_mode = #tpu.pipeline_mode<synchronous>, transform_indices = @transform_3, window_bounds = array<i64: 1, 96>}, {pipeline_mode = #tpu.pipeline_mode<synchronous>, transform_indices = @transform_4, window_bounds = array<i64: 1, 32>}, {pipeline_mode = #tpu.pipeline_mode<synchronous>, transform_indices = @transform_5, window_bounds = array<i64: 8, 32>}]} {
    %c0 = arith.constant 0 : index
    %c0_0 = arith.constant 0 : index
    %0 = vector.load %arg1[%c0, %c0_0] : memref<64x16xf32, #tpu.memory_space<vmem>>, vector<64x16xf32>
    %c0_1 = arith.constant 0 : index
    %c0_2 = arith.constant 0 : index
    %1 = vector.load %arg2[%c0_1, %c0_2] : memref<16x96xf32, #tpu.memory_space<vmem>>, vector<16x96xf32>
    %cst = arith.constant dense<0.000000e+00> : vector<64x96xf32>
    %2 = tpu.matmul %0, %1, %cst {dimension_numbers = #tpu.dot_dimension_numbers<[1], [0], [0], [1], [0, 0, 1, 1], [], []>} : vector<64x16xf32>, vector<16x96xf32>, vector<64x96xf32> -> vector<64x96xf32>
    %c0_3 = arith.constant 0 : index
    %c0_4 = arith.constant 0 : index
    %3 = vector.load %arg4[%c0_3, %c0_4] : memref<1x96xf32, #tpu.memory_space<vmem>>, vector<1x96xf32>
    %4 = vector.broadcast %3 : vector<1x96xf32> to vector<64x96xf32>
    %5 = arith.addf %2, %4 : vector<64x96xf32>
    %c0_5 = arith.constant 0 : index
    %c0_6 = arith.constant 0 : index
    %6 = vector.load %arg3[%c0_5, %c0_6] : memref<32x96xf32, #tpu.memory_space<vmem>>, vector<32x96xf32>
    %c0_7 = arith.constant 0 : index
    %c0_8 = arith.constant 0 : index
    %7 = vector.load %arg5[%c0_7, %c0_8] : memref<1x32xf32, #tpu.memory_space<vmem>>, vector<1x32xf32>
    %cst_9 = arith.constant 0.000000e+00 : f32
    %8 = vector.broadcast %cst_9 : f32 to vector<8x32xf32>
    %9 = vector.extract_strided_slice %5 {offsets = [0, 0], sizes = [8, 96], strides = [1, 1]} : vector<64x96xf32> to vector<8x96xf32>
    %cst_10 = arith.constant dense<0.000000e+00> : vector<8x96xf32>
    %10 = tpu.matmul %8, %6, %cst_10 {dimension_numbers = #tpu.dot_dimension_numbers<[1], [0], [0], [1], [0, 0, 1, 1], [], []>} : vector<8x32xf32>, vector<32x96xf32>, vector<8x96xf32> -> vector<8x96xf32>
    %11 = vector.extract_strided_slice %9 {offsets = [0, 0], sizes = [8, 64], strides = [1, 1]} : vector<8x96xf32> to vector<8x64xf32>
    %12 = vector.extract_strided_slice %10 {offsets = [0, 0], sizes = [8, 64], strides = [1, 1]} : vector<8x96xf32> to vector<8x64xf32>
    %13 = arith.addf %11, %12 : vector<8x64xf32>
    %14 = arith.negf %13 : vector<8x64xf32>
    %15 = math.exp %14 : vector<8x64xf32>
    %cst_11 = arith.constant 1.000000e+00 : f32
    %16 = vector.broadcast %cst_11 : f32 to vector<8x64xf32>
    %17 = arith.addf %16, %15 : vector<8x64xf32>
    %18 = arith.divf %16, %17 : vector<8x64xf32>
    %19 = vector.extract_strided_slice %18 {offsets = [0, 0], sizes = [8, 32], strides = [1, 1]} : vector<8x64xf32> to vector<8x32xf32>
    %20 = vector.extract_strided_slice %18 {offsets = [0, 32], sizes = [8, 32], strides = [1, 1]} : vector<8x64xf32> to vector<8x32xf32>
    %21 = vector.extract_strided_slice %9 {offsets = [0, 64], sizes = [8, 32], strides = [1, 1]} : vector<8x96xf32> to vector<8x32xf32>
    %22 = vector.extract_strided_slice %10 {offsets = [0, 64], sizes = [8, 32], strides = [1, 1]} : vector<8x96xf32> to vector<8x32xf32>
    %23 = vector.broadcast %7 : vector<1x32xf32> to vector<8x32xf32>
    %24 = arith.addf %22, %23 : vector<8x32xf32>
    %25 = arith.mulf %19, %24 : vector<8x32xf32>
    %26 = arith.addf %21, %25 : vector<8x32xf32>
    %27 = math.tanh %26 : vector<8x32xf32>
    %cst_12 = arith.constant 1.000000e+00 : f32
    %28 = vector.broadcast %cst_12 : f32 to vector<8x32xf32>
    %29 = arith.subf %28, %20 : vector<8x32xf32>
    %30 = arith.mulf %29, %27 : vector<8x32xf32>
    %31 = arith.mulf %20, %8 : vector<8x32xf32>
    %32 = arith.addf %30, %31 : vector<8x32xf32>
    %33 = vector.extract_strided_slice %5 {offsets = [8, 0], sizes = [8, 96], strides = [1, 1]} : vector<64x96xf32> to vector<8x96xf32>
    %cst_13 = arith.constant dense<0.000000e+00> : vector<8x96xf32>
    %34 = tpu.matmul %32, %6, %cst_13 {dimension_numbers = #tpu.dot_dimension_numbers<[1], [0], [0], [1], [0, 0, 1, 1], [], []>} : vector<8x32xf32>, vector<32x96xf32>, vector<8x96xf32> -> vector<8x96xf32>
    %35 = vector.extract_strided_slice %33 {offsets = [0, 0], sizes = [8, 64], strides = [1, 1]} : vector<8x96xf32> to vector<8x64xf32>
    %36 = vector.extract_strided_slice %34 {offsets = [0, 0], sizes = [8, 64], strides = [1, 1]} : vector<8x96xf32> to vector<8x64xf32>
    %37 = arith.addf %35, %36 : vector<8x64xf32>
    %38 = arith.negf %37 : vector<8x64xf32>
    %39 = math.exp %38 : vector<8x64xf32>
    %cst_14 = arith.constant 1.000000e+00 : f32
    %40 = vector.broadcast %cst_14 : f32 to vector<8x64xf32>
    %41 = arith.addf %40, %39 : vector<8x64xf32>
    %42 = arith.divf %40, %41 : vector<8x64xf32>
    %43 = vector.extract_strided_slice %42 {offsets = [0, 0], sizes = [8, 32], strides = [1, 1]} : vector<8x64xf32> to vector<8x32xf32>
    %44 = vector.extract_strided_slice %42 {offsets = [0, 32], sizes = [8, 32], strides = [1, 1]} : vector<8x64xf32> to vector<8x32xf32>
    %45 = vector.extract_strided_slice %33 {offsets = [0, 64], sizes = [8, 32], strides = [1, 1]} : vector<8x96xf32> to vector<8x32xf32>
    %46 = vector.extract_strided_slice %34 {offsets = [0, 64], sizes = [8, 32], strides = [1, 1]} : vector<8x96xf32> to vector<8x32xf32>
    %47 = vector.broadcast %7 : vector<1x32xf32> to vector<8x32xf32>
    %48 = arith.addf %46, %47 : vector<8x32xf32>
    %49 = arith.mulf %43, %48 : vector<8x32xf32>
    %50 = arith.addf %45, %49 : vector<8x32xf32>
    %51 = math.tanh %50 : vector<8x32xf32>
    %cst_15 = arith.constant 1.000000e+00 : f32
    %52 = vector.broadcast %cst_15 : f32 to vector<8x32xf32>
    %53 = arith.subf %52, %44 : vector<8x32xf32>
    %54 = arith.mulf %53, %51 : vector<8x32xf32>
    %55 = arith.mulf %44, %32 : vector<8x32xf32>
    %56 = arith.addf %54, %55 : vector<8x32xf32>
    %57 = vector.extract_strided_slice %5 {offsets = [16, 0], sizes = [8, 96], strides = [1, 1]} : vector<64x96xf32> to vector<8x96xf32>
    %cst_16 = arith.constant dense<0.000000e+00> : vector<8x96xf32>
    %58 = tpu.matmul %56, %6, %cst_16 {dimension_numbers = #tpu.dot_dimension_numbers<[1], [0], [0], [1], [0, 0, 1, 1], [], []>} : vector<8x32xf32>, vector<32x96xf32>, vector<8x96xf32> -> vector<8x96xf32>
    %59 = vector.extract_strided_slice %57 {offsets = [0, 0], sizes = [8, 64], strides = [1, 1]} : vector<8x96xf32> to vector<8x64xf32>
    %60 = vector.extract_strided_slice %58 {offsets = [0, 0], sizes = [8, 64], strides = [1, 1]} : vector<8x96xf32> to vector<8x64xf32>
    %61 = arith.addf %59, %60 : vector<8x64xf32>
    %62 = arith.negf %61 : vector<8x64xf32>
    %63 = math.exp %62 : vector<8x64xf32>
    %cst_17 = arith.constant 1.000000e+00 : f32
    %64 = vector.broadcast %cst_17 : f32 to vector<8x64xf32>
    %65 = arith.addf %64, %63 : vector<8x64xf32>
    %66 = arith.divf %64, %65 : vector<8x64xf32>
    %67 = vector.extract_strided_slice %66 {offsets = [0, 0], sizes = [8, 32], strides = [1, 1]} : vector<8x64xf32> to vector<8x32xf32>
    %68 = vector.extract_strided_slice %66 {offsets = [0, 32], sizes = [8, 32], strides = [1, 1]} : vector<8x64xf32> to vector<8x32xf32>
    %69 = vector.extract_strided_slice %57 {offsets = [0, 64], sizes = [8, 32], strides = [1, 1]} : vector<8x96xf32> to vector<8x32xf32>
    %70 = vector.extract_strided_slice %58 {offsets = [0, 64], sizes = [8, 32], strides = [1, 1]} : vector<8x96xf32> to vector<8x32xf32>
    %71 = vector.broadcast %7 : vector<1x32xf32> to vector<8x32xf32>
    %72 = arith.addf %70, %71 : vector<8x32xf32>
    %73 = arith.mulf %67, %72 : vector<8x32xf32>
    %74 = arith.addf %69, %73 : vector<8x32xf32>
    %75 = math.tanh %74 : vector<8x32xf32>
    %cst_18 = arith.constant 1.000000e+00 : f32
    %76 = vector.broadcast %cst_18 : f32 to vector<8x32xf32>
    %77 = arith.subf %76, %68 : vector<8x32xf32>
    %78 = arith.mulf %77, %75 : vector<8x32xf32>
    %79 = arith.mulf %68, %56 : vector<8x32xf32>
    %80 = arith.addf %78, %79 : vector<8x32xf32>
    %81 = vector.extract_strided_slice %5 {offsets = [24, 0], sizes = [8, 96], strides = [1, 1]} : vector<64x96xf32> to vector<8x96xf32>
    %cst_19 = arith.constant dense<0.000000e+00> : vector<8x96xf32>
    %82 = tpu.matmul %80, %6, %cst_19 {dimension_numbers = #tpu.dot_dimension_numbers<[1], [0], [0], [1], [0, 0, 1, 1], [], []>} : vector<8x32xf32>, vector<32x96xf32>, vector<8x96xf32> -> vector<8x96xf32>
    %83 = vector.extract_strided_slice %81 {offsets = [0, 0], sizes = [8, 64], strides = [1, 1]} : vector<8x96xf32> to vector<8x64xf32>
    %84 = vector.extract_strided_slice %82 {offsets = [0, 0], sizes = [8, 64], strides = [1, 1]} : vector<8x96xf32> to vector<8x64xf32>
    %85 = arith.addf %83, %84 : vector<8x64xf32>
    %86 = arith.negf %85 : vector<8x64xf32>
    %87 = math.exp %86 : vector<8x64xf32>
    %cst_20 = arith.constant 1.000000e+00 : f32
    %88 = vector.broadcast %cst_20 : f32 to vector<8x64xf32>
    %89 = arith.addf %88, %87 : vector<8x64xf32>
    %90 = arith.divf %88, %89 : vector<8x64xf32>
    %91 = vector.extract_strided_slice %90 {offsets = [0, 0], sizes = [8, 32], strides = [1, 1]} : vector<8x64xf32> to vector<8x32xf32>
    %92 = vector.extract_strided_slice %90 {offsets = [0, 32], sizes = [8, 32], strides = [1, 1]} : vector<8x64xf32> to vector<8x32xf32>
    %93 = vector.extract_strided_slice %81 {offsets = [0, 64], sizes = [8, 32], strides = [1, 1]} : vector<8x96xf32> to vector<8x32xf32>
    %94 = vector.extract_strided_slice %82 {offsets = [0, 64], sizes = [8, 32], strides = [1, 1]} : vector<8x96xf32> to vector<8x32xf32>
    %95 = vector.broadcast %7 : vector<1x32xf32> to vector<8x32xf32>
    %96 = arith.addf %94, %95 : vector<8x32xf32>
    %97 = arith.mulf %91, %96 : vector<8x32xf32>
    %98 = arith.addf %93, %97 : vector<8x32xf32>
    %99 = math.tanh %98 : vector<8x32xf32>
    %cst_21 = arith.constant 1.000000e+00 : f32
    %100 = vector.broadcast %cst_21 : f32 to vector<8x32xf32>
    %101 = arith.subf %100, %92 : vector<8x32xf32>
    %102 = arith.mulf %101, %99 : vector<8x32xf32>
    %103 = arith.mulf %92, %80 : vector<8x32xf32>
    %104 = arith.addf %102, %103 : vector<8x32xf32>
    %105 = vector.extract_strided_slice %5 {offsets = [32, 0], sizes = [8, 96], strides = [1, 1]} : vector<64x96xf32> to vector<8x96xf32>
    %cst_22 = arith.constant dense<0.000000e+00> : vector<8x96xf32>
    %106 = tpu.matmul %104, %6, %cst_22 {dimension_numbers = #tpu.dot_dimension_numbers<[1], [0], [0], [1], [0, 0, 1, 1], [], []>} : vector<8x32xf32>, vector<32x96xf32>, vector<8x96xf32> -> vector<8x96xf32>
    %107 = vector.extract_strided_slice %105 {offsets = [0, 0], sizes = [8, 64], strides = [1, 1]} : vector<8x96xf32> to vector<8x64xf32>
    %108 = vector.extract_strided_slice %106 {offsets = [0, 0], sizes = [8, 64], strides = [1, 1]} : vector<8x96xf32> to vector<8x64xf32>
    %109 = arith.addf %107, %108 : vector<8x64xf32>
    %110 = arith.negf %109 : vector<8x64xf32>
    %111 = math.exp %110 : vector<8x64xf32>
    %cst_23 = arith.constant 1.000000e+00 : f32
    %112 = vector.broadcast %cst_23 : f32 to vector<8x64xf32>
    %113 = arith.addf %112, %111 : vector<8x64xf32>
    %114 = arith.divf %112, %113 : vector<8x64xf32>
    %115 = vector.extract_strided_slice %114 {offsets = [0, 0], sizes = [8, 32], strides = [1, 1]} : vector<8x64xf32> to vector<8x32xf32>
    %116 = vector.extract_strided_slice %114 {offsets = [0, 32], sizes = [8, 32], strides = [1, 1]} : vector<8x64xf32> to vector<8x32xf32>
    %117 = vector.extract_strided_slice %105 {offsets = [0, 64], sizes = [8, 32], strides = [1, 1]} : vector<8x96xf32> to vector<8x32xf32>
    %118 = vector.extract_strided_slice %106 {offsets = [0, 64], sizes = [8, 32], strides = [1, 1]} : vector<8x96xf32> to vector<8x32xf32>
    %119 = vector.broadcast %7 : vector<1x32xf32> to vector<8x32xf32>
    %120 = arith.addf %118, %119 : vector<8x32xf32>
    %121 = arith.mulf %115, %120 : vector<8x32xf32>
    %122 = arith.addf %117, %121 : vector<8x32xf32>
    %123 = math.tanh %122 : vector<8x32xf32>
    %cst_24 = arith.constant 1.000000e+00 : f32
    %124 = vector.broadcast %cst_24 : f32 to vector<8x32xf32>
    %125 = arith.subf %124, %116 : vector<8x32xf32>
    %126 = arith.mulf %125, %123 : vector<8x32xf32>
    %127 = arith.mulf %116, %104 : vector<8x32xf32>
    %128 = arith.addf %126, %127 : vector<8x32xf32>
    %129 = vector.extract_strided_slice %5 {offsets = [40, 0], sizes = [8, 96], strides = [1, 1]} : vector<64x96xf32> to vector<8x96xf32>
    %cst_25 = arith.constant dense<0.000000e+00> : vector<8x96xf32>
    %130 = tpu.matmul %128, %6, %cst_25 {dimension_numbers = #tpu.dot_dimension_numbers<[1], [0], [0], [1], [0, 0, 1, 1], [], []>} : vector<8x32xf32>, vector<32x96xf32>, vector<8x96xf32> -> vector<8x96xf32>
    %131 = vector.extract_strided_slice %129 {offsets = [0, 0], sizes = [8, 64], strides = [1, 1]} : vector<8x96xf32> to vector<8x64xf32>
    %132 = vector.extract_strided_slice %130 {offsets = [0, 0], sizes = [8, 64], strides = [1, 1]} : vector<8x96xf32> to vector<8x64xf32>
    %133 = arith.addf %131, %132 : vector<8x64xf32>
    %134 = arith.negf %133 : vector<8x64xf32>
    %135 = math.exp %134 : vector<8x64xf32>
    %cst_26 = arith.constant 1.000000e+00 : f32
    %136 = vector.broadcast %cst_26 : f32 to vector<8x64xf32>
    %137 = arith.addf %136, %135 : vector<8x64xf32>
    %138 = arith.divf %136, %137 : vector<8x64xf32>
    %139 = vector.extract_strided_slice %138 {offsets = [0, 0], sizes = [8, 32], strides = [1, 1]} : vector<8x64xf32> to vector<8x32xf32>
    %140 = vector.extract_strided_slice %138 {offsets = [0, 32], sizes = [8, 32], strides = [1, 1]} : vector<8x64xf32> to vector<8x32xf32>
    %141 = vector.extract_strided_slice %129 {offsets = [0, 64], sizes = [8, 32], strides = [1, 1]} : vector<8x96xf32> to vector<8x32xf32>
    %142 = vector.extract_strided_slice %130 {offsets = [0, 64], sizes = [8, 32], strides = [1, 1]} : vector<8x96xf32> to vector<8x32xf32>
    %143 = vector.broadcast %7 : vector<1x32xf32> to vector<8x32xf32>
    %144 = arith.addf %142, %143 : vector<8x32xf32>
    %145 = arith.mulf %139, %144 : vector<8x32xf32>
    %146 = arith.addf %141, %145 : vector<8x32xf32>
    %147 = math.tanh %146 : vector<8x32xf32>
    %cst_27 = arith.constant 1.000000e+00 : f32
    %148 = vector.broadcast %cst_27 : f32 to vector<8x32xf32>
    %149 = arith.subf %148, %140 : vector<8x32xf32>
    %150 = arith.mulf %149, %147 : vector<8x32xf32>
    %151 = arith.mulf %140, %128 : vector<8x32xf32>
    %152 = arith.addf %150, %151 : vector<8x32xf32>
    %153 = vector.extract_strided_slice %5 {offsets = [48, 0], sizes = [8, 96], strides = [1, 1]} : vector<64x96xf32> to vector<8x96xf32>
    %cst_28 = arith.constant dense<0.000000e+00> : vector<8x96xf32>
    %154 = tpu.matmul %152, %6, %cst_28 {dimension_numbers = #tpu.dot_dimension_numbers<[1], [0], [0], [1], [0, 0, 1, 1], [], []>} : vector<8x32xf32>, vector<32x96xf32>, vector<8x96xf32> -> vector<8x96xf32>
    %155 = vector.extract_strided_slice %153 {offsets = [0, 0], sizes = [8, 64], strides = [1, 1]} : vector<8x96xf32> to vector<8x64xf32>
    %156 = vector.extract_strided_slice %154 {offsets = [0, 0], sizes = [8, 64], strides = [1, 1]} : vector<8x96xf32> to vector<8x64xf32>
    %157 = arith.addf %155, %156 : vector<8x64xf32>
    %158 = arith.negf %157 : vector<8x64xf32>
    %159 = math.exp %158 : vector<8x64xf32>
    %cst_29 = arith.constant 1.000000e+00 : f32
    %160 = vector.broadcast %cst_29 : f32 to vector<8x64xf32>
    %161 = arith.addf %160, %159 : vector<8x64xf32>
    %162 = arith.divf %160, %161 : vector<8x64xf32>
    %163 = vector.extract_strided_slice %162 {offsets = [0, 0], sizes = [8, 32], strides = [1, 1]} : vector<8x64xf32> to vector<8x32xf32>
    %164 = vector.extract_strided_slice %162 {offsets = [0, 32], sizes = [8, 32], strides = [1, 1]} : vector<8x64xf32> to vector<8x32xf32>
    %165 = vector.extract_strided_slice %153 {offsets = [0, 64], sizes = [8, 32], strides = [1, 1]} : vector<8x96xf32> to vector<8x32xf32>
    %166 = vector.extract_strided_slice %154 {offsets = [0, 64], sizes = [8, 32], strides = [1, 1]} : vector<8x96xf32> to vector<8x32xf32>
    %167 = vector.broadcast %7 : vector<1x32xf32> to vector<8x32xf32>
    %168 = arith.addf %166, %167 : vector<8x32xf32>
    %169 = arith.mulf %163, %168 : vector<8x32xf32>
    %170 = arith.addf %165, %169 : vector<8x32xf32>
    %171 = math.tanh %170 : vector<8x32xf32>
    %cst_30 = arith.constant 1.000000e+00 : f32
    %172 = vector.broadcast %cst_30 : f32 to vector<8x32xf32>
    %173 = arith.subf %172, %164 : vector<8x32xf32>
    %174 = arith.mulf %173, %171 : vector<8x32xf32>
    %175 = arith.mulf %164, %152 : vector<8x32xf32>
    %176 = arith.addf %174, %175 : vector<8x32xf32>
    %177 = vector.extract_strided_slice %5 {offsets = [56, 0], sizes = [8, 96], strides = [1, 1]} : vector<64x96xf32> to vector<8x96xf32>
    %cst_31 = arith.constant dense<0.000000e+00> : vector<8x96xf32>
    %178 = tpu.matmul %176, %6, %cst_31 {dimension_numbers = #tpu.dot_dimension_numbers<[1], [0], [0], [1], [0, 0, 1, 1], [], []>} : vector<8x32xf32>, vector<32x96xf32>, vector<8x96xf32> -> vector<8x96xf32>
    %179 = vector.extract_strided_slice %177 {offsets = [0, 0], sizes = [8, 64], strides = [1, 1]} : vector<8x96xf32> to vector<8x64xf32>
    %180 = vector.extract_strided_slice %178 {offsets = [0, 0], sizes = [8, 64], strides = [1, 1]} : vector<8x96xf32> to vector<8x64xf32>
    %181 = arith.addf %179, %180 : vector<8x64xf32>
    %182 = arith.negf %181 : vector<8x64xf32>
    %183 = math.exp %182 : vector<8x64xf32>
    %cst_32 = arith.constant 1.000000e+00 : f32
    %184 = vector.broadcast %cst_32 : f32 to vector<8x64xf32>
    %185 = arith.addf %184, %183 : vector<8x64xf32>
    %186 = arith.divf %184, %185 : vector<8x64xf32>
    %187 = vector.extract_strided_slice %186 {offsets = [0, 0], sizes = [8, 32], strides = [1, 1]} : vector<8x64xf32> to vector<8x32xf32>
    %188 = vector.extract_strided_slice %186 {offsets = [0, 32], sizes = [8, 32], strides = [1, 1]} : vector<8x64xf32> to vector<8x32xf32>
    %189 = vector.extract_strided_slice %177 {offsets = [0, 64], sizes = [8, 32], strides = [1, 1]} : vector<8x96xf32> to vector<8x32xf32>
    %190 = vector.extract_strided_slice %178 {offsets = [0, 64], sizes = [8, 32], strides = [1, 1]} : vector<8x96xf32> to vector<8x32xf32>
    %191 = vector.broadcast %7 : vector<1x32xf32> to vector<8x32xf32>
    %192 = arith.addf %190, %191 : vector<8x32xf32>
    %193 = arith.mulf %187, %192 : vector<8x32xf32>
    %194 = arith.addf %189, %193 : vector<8x32xf32>
    %195 = math.tanh %194 : vector<8x32xf32>
    %cst_33 = arith.constant 1.000000e+00 : f32
    %196 = vector.broadcast %cst_33 : f32 to vector<8x32xf32>
    %197 = arith.subf %196, %188 : vector<8x32xf32>
    %198 = arith.mulf %197, %195 : vector<8x32xf32>
    %199 = arith.mulf %188, %176 : vector<8x32xf32>
    %200 = arith.addf %198, %199 : vector<8x32xf32>
    %c0_34 = arith.constant 0 : index
    %c0_35 = arith.constant 0 : index
    %201 = vector.load %arg6[%c0_34, %c0_35] : memref<8x32xf32, #tpu.memory_space<vmem>>, vector<8x32xf32>
    tpu.vector_store %arg6[%c0_34, %c0_35], %200 {strides = array<i32>} : memref<8x32xf32, #tpu.memory_space<vmem>>, vector<8x32xf32>,
    return
  }
  func.func @transform_0(%arg0: i32) -> (i32, i32) {
    %c0_i32 = arith.constant 0 : i32
    %c0_i32_0 = arith.constant 0 : i32
    %c0_i32_1 = arith.constant 0 : i32
    return %c0_i32, %c0_i32_0 : i32, i32
  }
  func.func @transform_1(%arg0: i32) -> (i32, i32) {
    %c0_i32 = arith.constant 0 : i32
    %c0_i32_0 = arith.constant 0 : i32
    %c0_i32_1 = arith.constant 0 : i32
    return %c0_i32, %c0_i32_0 : i32, i32
  }
  func.func @transform_2(%arg0: i32) -> (i32, i32) {
    %c0_i32 = arith.constant 0 : i32
    %c0_i32_0 = arith.constant 0 : i32
    %c0_i32_1 = arith.constant 0 : i32
    return %c0_i32, %c0_i32_0 : i32, i32
  }
  func.func @transform_3(%arg0: i32) -> (i32, i32) {
    %c0_i32 = arith.constant 0 : i32
    %c0_i32_0 = arith.constant 0 : i32
    %c0_i32_1 = arith.constant 0 : i32
    return %c0_i32, %c0_i32_0 : i32, i32
  }
  func.func @transform_4(%arg0: i32) -> (i32, i32) {
    %c0_i32 = arith.constant 0 : i32
    %c0_i32_0 = arith.constant 0 : i32
    %c0_i32_1 = arith.constant 0 : i32
    return %c0_i32, %c0_i32_0 : i32, i32
  }
  func.func @transform_5(%arg0: i32) -> (i32, i32) {
    %c0_i32 = arith.constant 0 : i32
    %c0_i32_0 = arith.constant 0 : i32
    %c0_i32_1 = arith.constant 0 : i32
    return %c0_i32, %c0_i32_0 : i32, i32
  }
}

</mosaic_0001>

<llo_original>
// kernel: tpu_custom_call.1
$region0: #{tpu_custom_call.1}
  #allocation0 [shape = 'u32[]', space=smem, size = 0x4, offset = 0x4, fixed_abs, tag = 'smem constant byte address 0x4 - core index']
  #allocation1 [shape = 'u32[144,128]{1,0:T(1,128)}', space=vmem, size = 0x12000, scoped, tag = 'internal scratch']
  %s0 = inlined_call_operand.vmem [shape: f32[64,16], index: 0, kind: input, shape index: {}]
  %s1 = inlined_call_operand.vmem [shape: f32[16,96], index: 1, kind: input, shape index: {}]
  %s2 = inlined_call_operand.vmem [shape: f32[32,96], index: 2, kind: input, shape index: {}]
  %s3 = inlined_call_operand.vmem [shape: f32[1,96], index: 3, kind: input, shape index: {}]
  %s4 = inlined_call_operand.vmem [shape: f32[1,32], index: 4, kind: input, shape index: {}]
  %s5 = inlined_call_operand.hbm [shape: f32[8,32], index: 5, kind: output, shape index: {}]
  %s6 = sld [smem:[#allocation0]]
  $region30: #{tpu_custom_call.1} parent=0
    _
  %s8 = ssub.s32 1, %s6
  %s9 = scalar_select 0, %s8, %s6
  $region1: #{tpu_custom_call.1} parent=0
    #allocation2 [shape = 'u8[4096]{0}', space=vmem, size = 0x1000, scoped, tag = 'output window, operand 0, single buffered']
    #allocation3 [shape = 's32[1]{0}', space=sflag, size = 0x4, scoped, tag = 'scoped memory for tpu_custom_call.1']
    %10 = vsyncpa [#allocation3], 0
    // Predicated region
    $region2: #{tpu_custom_call.1} parent=1 // pred_check
      _
    $region3: #{tpu_custom_call.1} parent=1 // pred_check_branch
      %12 = sbr.rel (0) target = $region5
    $region4: #{tpu_custom_call.1} parent=1 // pred_region
      _
    $region5: #{tpu_custom_call.1} parent=1 // pred_fallthru
      _
    // Predicated region
    $region6: #{tpu_custom_call.1} parent=1 // pred_check
      _
    $region7: #{tpu_custom_call.1} parent=1 // pred_check_branch
      %14 = sbr.rel (0) target = $region9
    $region8: #{tpu_custom_call.1} parent=1 // pred_region
      _
    $region9: #{tpu_custom_call.1} parent=1 // pred_fallthru
      _
    // Predicated region
    $region10: #{tpu_custom_call.1} parent=1 // pred_check
      _
    $region11: #{tpu_custom_call.1} parent=1 // pred_check_branch
      %16 = sbr.rel (0) target = $region13
    $region12: #{tpu_custom_call.1} parent=1 // pred_region
      _
    $region13: #{tpu_custom_call.1} parent=1 // pred_fallthru
      _
    // Predicated region
    $region14: #{tpu_custom_call.1} parent=1 // pred_check
      _
    $region15: #{tpu_custom_call.1} parent=1 // pred_check_branch
      %18 = sbr.rel (0) target = $region17
    $region16: #{tpu_custom_call.1} parent=1 // pred_region
      _
    $region17: #{tpu_custom_call.1} parent=1 // pred_fallthru
      _
    // Predicated region
    $region18: #{tpu_custom_call.1} parent=1 // pred_check
      _
    $region19: #{tpu_custom_call.1} parent=1 // pred_check_branch
      %20 = sbr.rel (0) target = $region21
    $region20: #{tpu_custom_call.1} parent=1 // pred_region
      _
    $region21: #{tpu_custom_call.1} parent=1 // pred_fallthru
      _
    %v21 = vld [vmem:[%s0] sm:$0xff]
    %v22 = vld [vmem:[%s0 + $0x8] sm:$0xff]
    %v23 = vld [vmem:[%s0 + $0x10] sm:$0xff]
    %v24 = vld [vmem:[%s0 + $0x18] sm:$0xff]
    %v25 = vld [vmem:[%s0 + $0x20] sm:$0xff]
    %v26 = vld [vmem:[%s0 + $0x28] sm:$0xff]
    %v27 = vld [vmem:[%s0 + $0x30] sm:$0xff]
    %v28 = vld [vmem:[%s0 + $0x38] sm:$0xff]
    %v29 = vld [vmem:[%s1] sm:$0xff]
    %v30 = vld [vmem:[%s1 + $0x8] sm:$0xff]
    %v31 = vld [vmem:[%s3] sm:$0x1]
    %v33 = vlaneseq
    %v34 = vshrl.u32 %v33, 7
    %v35 = vsub.s32 0, %v34
    %v36 = vrot.slane %v31, %v35
    %vm38 = vcmask 130048
    %v40 = vsel %vm38, %v21, 0
    %v43 = vsel %vm38, %v22, 0
    %v46 = vsel %vm38, %v23, 0
    %v49 = vsel %vm38, %v24, 0
    %v52 = vsel %vm38, %v25, 0
    %v55 = vsel %vm38, %v26, 0
    %v58 = vsel %vm38, %v27, 0
    %v61 = vsel %vm38, %v28, 0
    %63 = vmatprep.subr.mxu0 0.0
    %64 = vmatpush1.msra.mxu0 %v29
    %65 = vmatprep.subr.mxu0 0.0
    %66 = vmatpush1.msra.mxu0 %v30
    %67 = vmatprep.subr.mxu0 0.0
    %68 = vmatpush1.msra.mxu0 0.0
    %69 = vmatprep.subr.mxu0 0.0
    %70 = vmatpush1.msra.mxu0 0.0
    %71 = vmatprep.subr.mxu0 0.0
    %72 = vmatpush1.msra.mxu0 0.0
    %73 = vmatprep.subr.mxu0 0.0
    %74 = vmatpush1.msra.mxu0 0.0
    %75 = vmatprep.subr.mxu0 0.0
    %76 = vmatpush1.msra.mxu0 0.0
    %77 = vmatprep.subr.mxu0 0.0
    %78 = vmatpush1.msra.mxu0 0.0
    %79 = vmatprep.subr.mxu0 0.0
    %80 = vmatpush1.msra.mxu0 0.0
    %81 = vmatprep.subr.mxu0 0.0
    %82 = vmatpush1.msra.mxu0 0.0
    %83 = vmatprep.subr.mxu0 0.0
    %84 = vmatpush1.msra.mxu0 0.0
    %85 = vmatprep.subr.mxu0 0.0
    %86 = vmatpush1.msra.mxu0 0.0
    %87 = vmatprep.subr.mxu0 0.0
    %88 = vmatpush1.msra.mxu0 0.0
    %89 = vmatprep.subr.mxu0 0.0
    %90 = vmatpush1.msra.mxu0 0.0
    %91 = vmatprep.subr.mxu0 0.0
    %92 = vmatpush1.msra.mxu0 0.0
    %93 = vmatprep.subr.mxu0 0.0
    %94 = vmatpush1.msra.mxu0 0.0
    %95 = vmatprep.subr.mxu0 0.0
    %96 = vmatpush1.msra.mxu0 0.0
    %97 = vmatprep.subr.mxu0 0.0
    %98 = vmatpush1.msra.mxu0 0.0
    %99 = vmatprep.subr.mxu0 0.0
    %100 = vmatpush1.msra.mxu0 0.0
    %101 = vmatprep.subr.mxu0 0.0
    %102 = vmatpush1.msra.mxu0 0.0
    %103 = vmatprep.subr.mxu0 0.0
    %104 = vmatpush1.msra.mxu0 0.0
    %105 = vmatprep.subr.mxu0 0.0
    %106 = vmatpush1.msra.mxu0 0.0
    %107 = vmatprep.subr.mxu0 0.0
    %108 = vmatpush1.msra.mxu0 0.0
    %109 = vmatprep.subr.mxu0 0.0
    %110 = vmatpush1.msra.mxu0 0.0
    %111 = vmatprep.subr.mxu0 0.0
    %112 = vmatpush1.msra.mxu0 0.0
    %113 = vmatprep.subr.mxu0 0.0
    %114 = vmatpush1.msra.mxu0 0.0
    %115 = vmatprep.subr.mxu0 0.0
    %116 = vmatpush1.msra.mxu0 0.0
    %117 = vmatprep.subr.mxu0 0.0
    %118 = vmatpush1.msra.mxu0 0.0
    %119 = vmatprep.subr.mxu0 0.0
    %120 = vmatpush1.msra.mxu0 0.0
    %121 = vmatprep.subr.mxu0 0.0
    %122 = vmatpush1.msra.mxu0 0.0
    %123 = vmatprep.subr.mxu0 0.0
    %124 = vmatpush1.msra.mxu0 0.0
    %125 = vmatprep.subr.mxu0 0.0
    %126 = vmatpush1.msra.mxu0 0.0
    %127 = vmatprep.mubr.f32.mxu0 0.0
    %128 = vmatmul.mubr.f32.gmra.mrb[0].mxu0 %v40
    %v129 = vpop.f32.mrb[0].mxu0
    %v130 = vadd.f32 %v36, %v129
    %v131 = vpop.f32.mrb[0].mxu0
    %132 = vmatprep.mubr.f32.mxu0 0.0
    %133 = vmatmul.mubr.f32.gmra.mrb[0].mxu0 %v43
    %v134 = vpop.f32.mrb[0].mxu0
    %v135 = vadd.f32 %v36, %v134
    %v136 = vpop.f32.mrb[0].mxu0
    %137 = vmatprep.mubr.f32.mxu0 0.0
    %138 = vmatmul.mubr.f32.gmra.mrb[0].mxu0 %v46
    %v139 = vpop.f32.mrb[0].mxu0
    %v140 = vadd.f32 %v36, %v139
    %v141 = vpop.f32.mrb[0].mxu0
    %142 = vmatprep.mubr.f32.mxu0 0.0
    %143 = vmatmul.mubr.f32.gmra.mrb[0].mxu0 %v49
    %v144 = vpop.f32.mrb[0].mxu0
    %v145 = vadd.f32 %v36, %v144
    %v146 = vpop.f32.mrb[0].mxu0
    %147 = vmatprep.mubr.f32.mxu0 0.0
    %148 = vmatmul.mubr.f32.gmra.mrb[0].mxu0 %v52
    %v149 = vpop.f32.mrb[0].mxu0
    %v150 = vadd.f32 %v36, %v149
    %v151 = vpop.f32.mrb[0].mxu0
    %152 = vmatprep.mubr.f32.mxu0 0.0
    %153 = vmatmul.mubr.f32.gmra.mrb[0].mxu0 %v55
    %v154 = vpop.f32.mrb[0].mxu0
    %v155 = vadd.f32 %v36, %v154
    %v156 = vpop.f32.mrb[0].mxu0
    %157 = vmatprep.mubr.f32.mxu0 0.0
    %158 = vmatmul.mubr.f32.gmra.mrb[0].mxu0 %v58
    %v159 = vpop.f32.mrb[0].mxu0
    %v160 = vadd.f32 %v36, %v159
    %v161 = vpop.f32.mrb[0].mxu0
    %162 = vmatprep.mubr.f32.mxu0 0.0
    %163 = vmatmul.mubr.f32.gmra.mrb[0].mxu0 %v61
    %v164 = vpop.f32.mrb[0].mxu0
    %v165 = vadd.f32 %v36, %v164
    %v166 = vpop.f32.mrb[0].mxu0
    %167 = vdwg.mxu0
    %v168 = vld [vmem:[%s2] sm:$0xff]
    %v169 = vld [vmem:[%s2 + $0x8] sm:$0xff]
    %v170 = vld [vmem:[%s2 + $0x10] sm:$0xff]
    %v171 = vld [vmem:[%s2 + $0x18] sm:$0xff]
    %v172 = vld [vmem:[%s4] sm:$0x1]
    %vm173 = vcmask 261120
    %v175 = vsel %vm173, 0.0, 0
    %177 = vmatprep.subr.mxu0 0.0
    %178 = vmatpush1.msra.mxu0 %v168
    %179 = vmatprep.subr.mxu0 0.0
    %180 = vmatpush1.msra.mxu0 %v169
    %181 = vmatprep.subr.mxu0 0.0
    %182 = vmatpush1.msra.mxu0 %v170
    %183 = vmatprep.subr.mxu0 0.0
    %184 = vmatpush1.msra.mxu0 %v171
    %185 = vmatprep.subr.mxu0 0.0
    %186 = vmatpush1.msra.mxu0 0.0
    %187 = vmatprep.subr.mxu0 0.0
    %188 = vmatpush1.msra.mxu0 0.0
    %189 = vmatprep.subr.mxu0 0.0
    %190 = vmatpush1.msra.mxu0 0.0
    %191 = vmatprep.subr.mxu0 0.0
    %192 = vmatpush1.msra.mxu0 0.0
    %193 = vmatprep.subr.mxu0 0.0
    %194 = vmatpush1.msra.mxu0 0.0
    %195 = vmatprep.subr.mxu0 0.0
    %196 = vmatpush1.msra.mxu0 0.0
    %197 = vmatprep.subr.mxu0 0.0
    %198 = vmatpush1.msra.mxu0 0.0
    %199 = vmatprep.subr.mxu0 0.0
    %200 = vmatpush1.msra.mxu0 0.0
    %201 = vmatprep.subr.mxu0 0.0
    %202 = vmatpush1.msra.mxu0 0.0
    %203 = vmatprep.subr.mxu0 0.0
    %204 = vmatpush1.msra.mxu0 0.0
    %205 = vmatprep.subr.mxu0 0.0
    %206 = vmatpush1.msra.mxu0 0.0
    %207 = vmatprep.subr.mxu0 0.0
    %208 = vmatpush1.msra.mxu0 0.0
    %209 = vmatprep.subr.mxu0 0.0
    %210 = vmatpush1.msra.mxu0 0.0
    %211 = vmatprep.subr.mxu0 0.0
    %212 = vmatpush1.msra.mxu0 0.0
    %213 = vmatprep.subr.mxu0 0.0
    %214 = vmatpush1.msra.mxu0 0.0
    %215 = vmatprep.subr.mxu0 0.0
    %216 = vmatpush1.msra.mxu0 0.0
    %217 = vmatprep.subr.mxu0 0.0
    %218 = vmatpush1.msra.mxu0 0.0
    %219 = vmatprep.subr.mxu0 0.0
    %220 = vmatpush1.msra.mxu0 0.0
    %221 = vmatprep.subr.mxu0 0.0
    %222 = vmatpush1.msra.mxu0 0.0
    %223 = vmatprep.subr.mxu0 0.0
    %224 = vmatpush1.msra.mxu0 0.0
    %225 = vmatprep.subr.mxu0 0.0
    %226 = vmatpush1.msra.mxu0 0.0
    %227 = vmatprep.subr.mxu0 0.0
    %228 = vmatpush1.msra.mxu0 0.0
    %229 = vmatprep.subr.mxu0 0.0
    %230 = vmatpush1.msra.mxu0 0.0
    %231 = vmatprep.subr.mxu0 0.0
    %232 = vmatpush1.msra.mxu0 0.0
    %233 = vmatprep.subr.mxu0 0.0
    %234 = vmatpush1.msra.mxu0 0.0
    %235 = vmatprep.subr.mxu0 0.0
    %236 = vmatpush1.msra.mxu0 0.0
    %237 = vmatprep.subr.mxu0 0.0
    %238 = vmatpush1.msra.mxu0 0.0
    %239 = vmatprep.subr.mxu0 0.0
    %240 = vmatpush1.msra.mxu0 0.0
    %241 = vmatprep.mubr.f32.mxu0 0.0
    %242 = vmatmul.mubr.f32.gmra.mrb[0].mxu0 %v175
    %v243 = vpop.f32.mrb[0].mxu0
    %v244 = vadd.f32 0.0, %v243
    %v245 = vpop.f32.mrb[0].mxu0
    %246 = vdwg.mxu0
    %v247 = vadd.f32 %v130, %v244
    %v248 = vxor.u32 %v247, 2147483648
    %v249 = vmul.f32 %v248, 1.442695
    %v250 = vpow.pop %v249
    %v251 = vadd.f32 %v250, 1.0
    %v252 = vrcp.pop %v251
    %v253 = vmul.f32 1.0, %v252
    %v255 = vlaneseq
    %v256 = vshrl.u32 %v255, 7
    %v257 = vsub.s32 0, %v256
    %v258 = vrot.slane %v172, %v257
    %259 = vrot.lane.b32.xlu0 %v258, 64
    %v260 = vpop.permute.xlu0 %259
    %v262 = vadd.f32 %v244, %v260
    %264 = vrot.lane.b32.xlu0 %v262, 64
    %v265 = vpop.permute.xlu0 %264
    %v267 = vmul.f32 %v253, %v265
    %269 = vrot.lane.b32.xlu0 %v267, 64
    %v270 = vpop.permute.xlu0 %269
    %v272 = vadd.f32 %v130, %v270
    %v273 = vtanh.pop %v272
    %v274 = vsub.f32 1.0, %v253
    %276 = vrot.lane.b32.xlu0 %v273, 96
    %v277 = vpop.permute.xlu0 %276
    %v279 = vmul.f32 %v274, %v277
    %v280 = vmul.f32 %v253, 0.0
    %v281 = vadd.f32 %v279, %v280
    %283 = vrot.lane.b32.xlu0 %v281, 96
    %v284 = vpop.permute.xlu0 %283
    %v285 = vsel %vm173, %v284, 0
    %287 = vmatprep.subr.mxu0 0.0
    %288 = vmatpush1.msra.mxu0 %v168
    %289 = vmatprep.subr.mxu0 0.0
    %290 = vmatpush1.msra.mxu0 %v169
    %291 = vmatprep.subr.mxu0 0.0
    %292 = vmatpush1.msra.mxu0 %v170
    %293 = vmatprep.subr.mxu0 0.0
    %294 = vmatpush1.msra.mxu0 %v171
    %295 = vmatprep.subr.mxu0 0.0
    %296 = vmatpush1.msra.mxu0 0.0
    %297 = vmatprep.subr.mxu0 0.0
    %298 = vmatpush1.msra.mxu0 0.0
    %299 = vmatprep.subr.mxu0 0.0
    %300 = vmatpush1.msra.mxu0 0.0
    %301 = vmatprep.subr.mxu0 0.0
    %302 = vmatpush1.msra.mxu0 0.0
    %303 = vmatprep.subr.mxu0 0.0
    %304 = vmatpush1.msra.mxu0 0.0
    %305 = vmatprep.subr.mxu0 0.0
    %306 = vmatpush1.msra.mxu0 0.0
    %307 = vmatprep.subr.mxu0 0.0
    %308 = vmatpush1.msra.mxu0 0.0
    %309 = vmatprep.subr.mxu0 0.0
    %310 = vmatpush1.msra.mxu0 0.0
    %311 = vmatprep.subr.mxu0 0.0
    %312 = vmatpush1.msra.mxu0 0.0
    %313 = vmatprep.subr.mxu0 0.0
    %314 = vmatpush1.msra.mxu0 0.0
    %315 = vmatprep.subr.mxu0 0.0
    %316 = vmatpush1.msra.mxu0 0.0
    %317 = vmatprep.subr.mxu0 0.0
    %318 = vmatpush1.msra.mxu0 0.0
    %319 = vmatprep.subr.mxu0 0.0
    %320 = vmatpush1.msra.mxu0 0.0
    %321 = vmatprep.subr.mxu0 0.0
    %322 = vmatpush1.msra.mxu0 0.0
    %323 = vmatprep.subr.mxu0 0.0
    %324 = vmatpush1.msra.mxu0 0.0
    %325 = vmatprep.subr.mxu0 0.0
    %326 = vmatpush1.msra.mxu0 0.0
    %327 = vmatprep.subr.mxu0 0.0
    %328 = vmatpush1.msra.mxu0 0.0
    %329 = vmatprep.subr.mxu0 0.0
    %330 = vmatpush1.msra.mxu0 0.0
    %331 = vmatprep.subr.mxu0 0.0
    %332 = vmatpush1.msra.mxu0 0.0
    %333 = vmatprep.subr.mxu0 0.0
    %334 = vmatpush1.msra.mxu0 0.0
    %335 = vmatprep.subr.mxu0 0.0
    %336 = vmatpush1.msra.mxu0 0.0
    %337 = vmatprep.subr.mxu0 0.0
    %338 = vmatpush1.msra.mxu0 0.0
    %339 = vmatprep.subr.mxu0 0.0
    %340 = vmatpush1.msra.mxu0 0.0
    %341 = vmatprep.subr.mxu0 0.0
    %342 = vmatpush1.msra.mxu0 0.0
    %343 = vmatprep.subr.mxu0 0.0
    %344 = vmatpush1.msra.mxu0 0.0
    %345 = vmatprep.subr.mxu0 0.0
    %346 = vmatpush1.msra.mxu0 0.0
    %347 = vmatprep.subr.mxu0 0.0
    %348 = vmatpush1.msra.mxu0 0.0
    %349 = vmatprep.subr.mxu0 0.0
    %350 = vmatpush1.msra.mxu0 0.0
    %351 = vmatprep.mubr.f32.mxu0 0.0
    %352 = vmatmul.mubr.f32.gmra.mrb[0].mxu0 %v285
    %v353 = vpop.f32.mrb[0].mxu0
    %v354 = vadd.f32 0.0, %v353
    %v355 = vpop.f32.mrb[0].mxu0
    %356 = vdwg.mxu0
    %v357 = vadd.f32 %v135, %v354
    %v358 = vxor.u32 %v357, 2147483648
    %v359 = vmul.f32 %v358, 1.442695
    %v360 = vpow.pop %v359
    %v361 = vadd.f32 %v360, 1.0
    %v362 = vrcp.pop %v361
    %v363 = vmul.f32 1.0, %v362
    %v364 = vadd.f32 %v354, %v260
    %366 = vrot.lane.b32.xlu0 %v364, 64
    %v367 = vpop.permute.xlu0 %366
    %v369 = vmul.f32 %v363, %v367
    %371 = vrot.lane.b32.xlu0 %v369, 64
    %v372 = vpop.permute.xlu0 %371
    %v374 = vadd.f32 %v135, %v372
    %v375 = vtanh.pop %v374
    %v376 = vsub.f32 1.0, %v363
    %378 = vrot.lane.b32.xlu0 %v375, 96
    %v379 = vpop.permute.xlu0 %378
    %v381 = vmul.f32 %v376, %v379
    %v382 = vmul.f32 %v363, %v281
    %v383 = vadd.f32 %v381, %v382
    %385 = vrot.lane.b32.xlu0 %v383, 96
    %v386 = vpop.permute.xlu0 %385
    %v387 = vsel %vm173, %v386, 0
    %389 = vmatprep.subr.mxu0 0.0
    %390 = vmatpush1.msra.mxu0 %v168
    %391 = vmatprep.subr.mxu0 0.0
    %392 = vmatpush1.msra.mxu0 %v169
    %393 = vmatprep.subr.mxu0 0.0
    %394 = vmatpush1.msra.mxu0 %v170
    %395 = vmatprep.subr.mxu0 0.0
    %396 = vmatpush1.msra.mxu0 %v171
    %397 = vmatprep.subr.mxu0 0.0
    %398 = vmatpush1.msra.mxu0 0.0
    %399 = vmatprep.subr.mxu0 0.0
    %400 = vmatpush1.msra.mxu0 0.0
    %401 = vmatprep.subr.mxu0 0.0
    %402 = vmatpush1.msra.mxu0 0.0
    %403 = vmatprep.subr.mxu0 0.0
    %404 = vmatpush1.msra.mxu0 0.0
    %405 = vmatprep.subr.mxu0 0.0
    %406 = vmatpush1.msra.mxu0 0.0
    %407 = vmatprep.subr.mxu0 0.0
    %408 = vmatpush1.msra.mxu0 0.0
    %409 = vmatprep.subr.mxu0 0.0
    %410 = vmatpush1.msra.mxu0 0.0
    %411 = vmatprep.subr.mxu0 0.0
    %412 = vmatpush1.msra.mxu0 0.0
    %413 = vmatprep.subr.mxu0 0.0
    %414 = vmatpush1.msra.mxu0 0.0
    %415 = vmatprep.subr.mxu0 0.0
    %416 = vmatpush1.msra.mxu0 0.0
    %417 = vmatprep.subr.mxu0 0.0
    %418 = vmatpush1.msra.mxu0 0.0
    %419 = vmatprep.subr.mxu0 0.0
    %420 = vmatpush1.msra.mxu0 0.0
    %421 = vmatprep.subr.mxu0 0.0
    %422 = vmatpush1.msra.mxu0 0.0
    %423 = vmatprep.subr.mxu0 0.0
    %424 = vmatpush1.msra.mxu0 0.0
    %425 = vmatprep.subr.mxu0 0.0
    %426 = vmatpush1.msra.mxu0 0.0
    %427 = vmatprep.subr.mxu0 0.0
    %428 = vmatpush1.msra.mxu0 0.0
    %429 = vmatprep.subr.mxu0 0.0
    %430 = vmatpush1.msra.mxu0 0.0
    %431 = vmatprep.subr.mxu0 0.0
    %432 = vmatpush1.msra.mxu0 0.0
    %433 = vmatprep.subr.mxu0 0.0
    %434 = vmatpush1.msra.mxu0 0.0
    %435 = vmatprep.subr.mxu0 0.0
    %436 = vmatpush1.msra.mxu0 0.0
    %437 = vmatprep.subr.mxu0 0.0
    %438 = vmatpush1.msra.mxu0 0.0
    %439 = vmatprep.subr.mxu0 0.0
    %440 = vmatpush1.msra.mxu0 0.0
    %441 = vmatprep.subr.mxu0 0.0
    %442 = vmatpush1.msra.mxu0 0.0
    %443 = vmatprep.subr.mxu0 0.0
    %444 = vmatpush1.msra.mxu0 0.0
    %445 = vmatprep.subr.mxu0 0.0
    %446 = vmatpush1.msra.mxu0 0.0
    %447 = vmatprep.subr.mxu0 0.0
    %448 = vmatpush1.msra.mxu0 0.0
    %449 = vmatprep.subr.mxu0 0.0
    %450 = vmatpush1.msra.mxu0 0.0
    %451 = vmatprep.subr.mxu0 0.0
    %452 = vmatpush1.msra.mxu0 0.0
    %453 = vmatprep.mubr.f32.mxu0 0.0
    %454 = vmatmul.mubr.f32.gmra.mrb[0].mxu0 %v387
    %v455 = vpop.f32.mrb[0].mxu0
    %v456 = vadd.f32 0.0, %v455
    %v457 = vpop.f32.mrb[0].mxu0
    %458 = vdwg.mxu0
    %v459 = vadd.f32 %v140, %v456
    %v460 = vxor.u32 %v459, 2147483648
    %v461 = vmul.f32 %v460, 1.442695
    %v462 = vpow.pop %v461
    %v463 = vadd.f32 %v462, 1.0
    %v464 = vrcp.pop %v463
    %v465 = vmul.f32 1.0, %v464
    %v466 = vadd.f32 %v456, %v260
    %468 = vrot.lane.b32.xlu0 %v466, 64
    %v469 = vpop.permute.xlu0 %468
    %v471 = vmul.f32 %v465, %v469
    %473 = vrot.lane.b32.xlu0 %v471, 64
    %v474 = vpop.permute.xlu0 %473
    %v476 = vadd.f32 %v140, %v474
    %v477 = vtanh.pop %v476
    %v478 = vsub.f32 1.0, %v465
    %480 = vrot.lane.b32.xlu0 %v477, 96
    %v481 = vpop.permute.xlu0 %480
    %v483 = vmul.f32 %v478, %v481
    %v484 = vmul.f32 %v465, %v383
    %v485 = vadd.f32 %v483, %v484
    %487 = vrot.lane.b32.xlu0 %v485, 96
    %v488 = vpop.permute.xlu0 %487
    %v489 = vsel %vm173, %v488, 0
    %491 = vmatprep.subr.mxu0 0.0
    %492 = vmatpush1.msra.mxu0 %v168
    %493 = vmatprep.subr.mxu0 0.0
    %494 = vmatpush1.msra.mxu0 %v169
    %495 = vmatprep.subr.mxu0 0.0
    %496 = vmatpush1.msra.mxu0 %v170
    %497 = vmatprep.subr.mxu0 0.0
    %498 = vmatpush1.msra.mxu0 %v171
    %499 = vmatprep.subr.mxu0 0.0
    %500 = vmatpush1.msra.mxu0 0.0
    %501 = vmatprep.subr.mxu0 0.0
    %502 = vmatpush1.msra.mxu0 0.0
    %503 = vmatprep.subr.mxu0 0.0
    %504 = vmatpush1.msra.mxu0 0.0
    %505 = vmatprep.subr.mxu0 0.0
    %506 = vmatpush1.msra.mxu0 0.0
    %507 = vmatprep.subr.mxu0 0.0
    %508 = vmatpush1.msra.mxu0 0.0
    %509 = vmatprep.subr.mxu0 0.0
    %510 = vmatpush1.msra.mxu0 0.0
    %511 = vmatprep.subr.mxu0 0.0
    %512 = vmatpush1.msra.mxu0 0.0
    %513 = vmatprep.subr.mxu0 0.0
    %514 = vmatpush1.msra.mxu0 0.0
    %515 = vmatprep.subr.mxu0 0.0
    %516 = vmatpush1.msra.mxu0 0.0
    %517 = vmatprep.subr.mxu0 0.0
    %518 = vmatpush1.msra.mxu0 0.0
    %519 = vmatprep.subr.mxu0 0.0
    %520 = vmatpush1.msra.mxu0 0.0
    %521 = vmatprep.subr.mxu0 0.0
    %522 = vmatpush1.msra.mxu0 0.0
    %523 = vmatprep.subr.mxu0 0.0
    %524 = vmatpush1.msra.mxu0 0.0
    %525 = vmatprep.subr.mxu0 0.0
    %526 = vmatpush1.msra.mxu0 0.0
    %527 = vmatprep.subr.mxu0 0.0
    %528 = vmatpush1.msra.mxu0 0.0
    %529 = vmatprep.subr.mxu0 0.0
    %530 = vmatpush1.msra.mxu0 0.0
    %531 = vmatprep.subr.mxu0 0.0
    %532 = vmatpush1.msra.mxu0 0.0
    %533 = vmatprep.subr.mxu0 0.0
    %534 = vmatpush1.msra.mxu0 0.0
    %535 = vmatprep.subr.mxu0 0.0
    %536 = vmatpush1.msra.mxu0 0.0
    %537 = vmatprep.subr.mxu0 0.0
    %538 = vmatpush1.msra.mxu0 0.0
    %539 = vmatprep.subr.mxu0 0.0
    %540 = vmatpush1.msra.mxu0 0.0
    %541 = vmatprep.subr.mxu0 0.0
    %542 = vmatpush1.msra.mxu0 0.0
    %543 = vmatprep.subr.mxu0 0.0
    %544 = vmatpush1.msra.mxu0 0.0
    %545 = vmatprep.subr.mxu0 0.0
    %546 = vmatpush1.msra.mxu0 0.0
    %547 = vmatprep.subr.mxu0 0.0
    %548 = vmatpush1.msra.mxu0 0.0
    %549 = vmatprep.subr.mxu0 0.0
    %550 = vmatpush1.msra.mxu0 0.0
    %551 = vmatprep.subr.mxu0 0.0
    %552 = vmatpush1.msra.mxu0 0.0
    %553 = vmatprep.subr.mxu0 0.0
    %554 = vmatpush1.msra.mxu0 0.0
    %555 = vmatprep.mubr.f32.mxu0 0.0
    %556 = vmatmul.mubr.f32.gmra.mrb[0].mxu0 %v489
    %v557 = vpop.f32.mrb[0].mxu0
    %v558 = vadd.f32 0.0, %v557
    %v559 = vpop.f32.mrb[0].mxu0
    %560 = vdwg.mxu0
    %v561 = vadd.f32 %v145, %v558
    %v562 = vxor.u32 %v561, 2147483648
    %v563 = vmul.f32 %v562, 1.442695
    %v564 = vpow.pop %v563
    %v565 = vadd.f32 %v564, 1.0
    %v566 = vrcp.pop %v565
    %v567 = vmul.f32 1.0, %v566
    %v568 = vadd.f32 %v558, %v260
    %570 = vrot.lane.b32.xlu0 %v568, 64
    %v571 = vpop.permute.xlu0 %570
    %v573 = vmul.f32 %v567, %v571
    %575 = vrot.lane.b32.xlu0 %v573, 64
    %v576 = vpop.permute.xlu0 %575
    %v578 = vadd.f32 %v145, %v576
    %v579 = vtanh.pop %v578
    %v580 = vsub.f32 1.0, %v567
    %582 = vrot.lane.b32.xlu0 %v579, 96
    %v583 = vpop.permute.xlu0 %582
    %v585 = vmul.f32 %v580, %v583
    %v586 = vmul.f32 %v567, %v485
    %v587 = vadd.f32 %v585, %v586
    %589 = vrot.lane.b32.xlu0 %v587, 96
    %v590 = vpop.permute.xlu0 %589
    %v591 = vsel %vm173, %v590, 0
    %593 = vmatprep.subr.mxu0 0.0
    %594 = vmatpush1.msra.mxu0 %v168
    %595 = vmatprep.subr.mxu0 0.0
    %596 = vmatpush1.msra.mxu0 %v169
    %597 = vmatprep.subr.mxu0 0.0
    %598 = vmatpush1.msra.mxu0 %v170
    %599 = vmatprep.subr.mxu0 0.0
    %600 = vmatpush1.msra.mxu0 %v171
    %601 = vmatprep.subr.mxu0 0.0
    %602 = vmatpush1.msra.mxu0 0.0
    %603 = vmatprep.subr.mxu0 0.0
    %604 = vmatpush1.msra.mxu0 0.0
    %605 = vmatprep.subr.mxu0 0.0
    %606 = vmatpush1.msra.mxu0 0.0
    %607 = vmatprep.subr.mxu0 0.0
    %608 = vmatpush1.msra.mxu0 0.0
    %609 = vmatprep.subr.mxu0 0.0
    %610 = vmatpush1.msra.mxu0 0.0
    %611 = vmatprep.subr.mxu0 0.0
    %612 = vmatpush1.msra.mxu0 0.0
    %613 = vmatprep.subr.mxu0 0.0
    %614 = vmatpush1.msra.mxu0 0.0
    %615 = vmatprep.subr.mxu0 0.0
    %616 = vmatpush1.msra.mxu0 0.0
    %617 = vmatprep.subr.mxu0 0.0
    %618 = vmatpush1.msra.mxu0 0.0
    %619 = vmatprep.subr.mxu0 0.0
    %620 = vmatpush1.msra.mxu0 0.0
    %621 = vmatprep.subr.mxu0 0.0
    %622 = vmatpush1.msra.mxu0 0.0
    %623 = vmatprep.subr.mxu0 0.0
    %624 = vmatpush1.msra.mxu0 0.0
    %625 = vmatprep.subr.mxu0 0.0
    %626 = vmatpush1.msra.mxu0 0.0
    %627 = vmatprep.subr.mxu0 0.0
    %628 = vmatpush1.msra.mxu0 0.0
    %629 = vmatprep.subr.mxu0 0.0
    %630 = vmatpush1.msra.mxu0 0.0
    %631 = vmatprep.subr.mxu0 0.0
    %632 = vmatpush1.msra.mxu0 0.0
    %633 = vmatprep.subr.mxu0 0.0
    %634 = vmatpush1.msra.mxu0 0.0
    %635 = vmatprep.subr.mxu0 0.0
    %636 = vmatpush1.msra.mxu0 0.0
    %637 = vmatprep.subr.mxu0 0.0
    %638 = vmatpush1.msra.mxu0 0.0
    %639 = vmatprep.subr.mxu0 0.0
    %640 = vmatpush1.msra.mxu0 0.0
    %641 = vmatprep.subr.mxu0 0.0
    %642 = vmatpush1.msra.mxu0 0.0
    %643 = vmatprep.subr.mxu0 0.0
    %644 = vmatpush1.msra.mxu0 0.0
    %645 = vmatprep.subr.mxu0 0.0
    %646 = vmatpush1.msra.mxu0 0.0
    %647 = vmatprep.subr.mxu0 0.0
    %648 = vmatpush1.msra.mxu0 0.0
    %649 = vmatprep.subr.mxu0 0.0
    %650 = vmatpush1.msra.mxu0 0.0
    %651 = vmatprep.subr.mxu0 0.0
    %652 = vmatpush1.msra.mxu0 0.0
    %653 = vmatprep.subr.mxu0 0.0
    %654 = vmatpush1.msra.mxu0 0.0
    %655 = vmatprep.subr.mxu0 0.0
    %656 = vmatpush1.msra.mxu0 0.0
    %657 = vmatprep.mubr.f32.mxu0 0.0
    %658 = vmatmul.mubr.f32.gmra.mrb[0].mxu0 %v591
    %v659 = vpop.f32.mrb[0].mxu0
    %v660 = vadd.f32 0.0, %v659
    %v661 = vpop.f32.mrb[0].mxu0
    %662 = vdwg.mxu0
    %v663 = vadd.f32 %v150, %v660
    %v664 = vxor.u32 %v663, 2147483648
    %v665 = vmul.f32 %v664, 1.442695
    %v666 = vpow.pop %v665
    %v667 = vadd.f32 %v666, 1.0
    %v668 = vrcp.pop %v667
    %v669 = vmul.f32 1.0, %v668
    %v670 = vadd.f32 %v660, %v260
    %672 = vrot.lane.b32.xlu0 %v670, 64
    %v673 = vpop.permute.xlu0 %672
    %v675 = vmul.f32 %v669, %v673
    %677 = vrot.lane.b32.xlu0 %v675, 64
    %v678 = vpop.permute.xlu0 %677
    %v680 = vadd.f32 %v150, %v678
    %v681 = vtanh.pop %v680
    %v682 = vsub.f32 1.0, %v669
    %684 = vrot.lane.b32.xlu0 %v681, 96
    %v685 = vpop.permute.xlu0 %684
    %v687 = vmul.f32 %v682, %v685
    %v688 = vmul.f32 %v669, %v587
    %v689 = vadd.f32 %v687, %v688
    %691 = vrot.lane.b32.xlu0 %v689, 96
    %v692 = vpop.permute.xlu0 %691
    %v693 = vsel %vm173, %v692, 0
    %695 = vmatprep.subr.mxu0 0.0
    %696 = vmatpush1.msra.mxu0 %v168
    %697 = vmatprep.subr.mxu0 0.0
    %698 = vmatpush1.msra.mxu0 %v169
    %699 = vmatprep.subr.mxu0 0.0
    %700 = vmatpush1.msra.mxu0 %v170
    %701 = vmatprep.subr.mxu0 0.0
    %702 = vmatpush1.msra.mxu0 %v171
    %703 = vmatprep.subr.mxu0 0.0
    %704 = vmatpush1.msra.mxu0 0.0
    %705 = vmatprep.subr.mxu0 0.0
    %706 = vmatpush1.msra.mxu0 0.0
    %707 = vmatprep.subr.mxu0 0.0
    %708 = vmatpush1.msra.mxu0 0.0
    %709 = vmatprep.subr.mxu0 0.0
    %710 = vmatpush1.msra.mxu0 0.0
    %711 = vmatprep.subr.mxu0 0.0
    %712 = vmatpush1.msra.mxu0 0.0
    %713 = vmatprep.subr.mxu0 0.0
    %714 = vmatpush1.msra.mxu0 0.0
    %715 = vmatprep.subr.mxu0 0.0
    %716 = vmatpush1.msra.mxu0 0.0
    %717 = vmatprep.subr.mxu0 0.0
    %718 = vmatpush1.msra.mxu0 0.0
    %719 = vmatprep.subr.mxu0 0.0
    %720 = vmatpush1.msra.mxu0 0.0
    %721 = vmatprep.subr.mxu0 0.0
    %722 = vmatpush1.msra.mxu0 0.0
    %723 = vmatprep.subr.mxu0 0.0
    %724 = vmatpush1.msra.mxu0 0.0
    %725 = vmatprep.subr.mxu0 0.0
    %726 = vmatpush1.msra.mxu0 0.0
    %727 = vmatprep.subr.mxu0 0.0
    %728 = vmatpush1.msra.mxu0 0.0
    %729 = vmatprep.subr.mxu0 0.0
    %730 = vmatpush1.msra.mxu0 0.0
    %731 = vmatprep.subr.mxu0 0.0
    %732 = vmatpush1.msra.mxu0 0.0
    %733 = vmatprep.subr.mxu0 0.0
    %734 = vmatpush1.msra.mxu0 0.0
    %735 = vmatprep.subr.mxu0 0.0
    %736 = vmatpush1.msra.mxu0 0.0
    %737 = vmatprep.subr.mxu0 0.0
    %738 = vmatpush1.msra.mxu0 0.0
    %739 = vmatprep.subr.mxu0 0.0
    %740 = vmatpush1.msra.mxu0 0.0
    %741 = vmatprep.subr.mxu0 0.0
    %742 = vmatpush1.msra.mxu0 0.0
    %743 = vmatprep.subr.mxu0 0.0
    %744 = vmatpush1.msra.mxu0 0.0
    %745 = vmatprep.subr.mxu0 0.0
    %746 = vmatpush1.msra.mxu0 0.0
    %747 = vmatprep.subr.mxu0 0.0
    %748 = vmatpush1.msra.mxu0 0.0
    %749 = vmatprep.subr.mxu0 0.0
    %750 = vmatpush1.msra.mxu0 0.0
    %751 = vmatprep.subr.mxu0 0.0
    %752 = vmatpush1.msra.mxu0 0.0
    %753 = vmatprep.subr.mxu0 0.0
    %754 = vmatpush1.msra.mxu0 0.0
    %755 = vmatprep.subr.mxu0 0.0
    %756 = vmatpush1.msra.mxu0 0.0
    %757 = vmatprep.subr.mxu0 0.0
    %758 = vmatpush1.msra.mxu0 0.0
    %759 = vmatprep.mubr.f32.mxu0 0.0
    %760 = vmatmul.mubr.f32.gmra.mrb[0].mxu0 %v693
    %v761 = vpop.f32.mrb[0].mxu0
    %v762 = vadd.f32 0.0, %v761
    %v763 = vpop.f32.mrb[0].mxu0
    %764 = vdwg.mxu0
    %v765 = vadd.f32 %v155, %v762
    %v766 = vxor.u32 %v765, 2147483648
    %v767 = vmul.f32 %v766, 1.442695
    %v768 = vpow.pop %v767
    %v769 = vadd.f32 %v768, 1.0
    %v770 = vrcp.pop %v769
    %v771 = vmul.f32 1.0, %v770
    %v772 = vadd.f32 %v762, %v260
    %774 = vrot.lane.b32.xlu0 %v772, 64
    %v775 = vpop.permute.xlu0 %774
    %v777 = vmul.f32 %v771, %v775
    %779 = vrot.lane.b32.xlu0 %v777, 64
    %v780 = vpop.permute.xlu0 %779
    %v782 = vadd.f32 %v155, %v780
    %v783 = vtanh.pop %v782
    %v784 = vsub.f32 1.0, %v771
    %786 = vrot.lane.b32.xlu0 %v783, 96
    %v787 = vpop.permute.xlu0 %786
    %v789 = vmul.f32 %v784, %v787
    %v790 = vmul.f32 %v771, %v689
    %v791 = vadd.f32 %v789, %v790
    %793 = vrot.lane.b32.xlu0 %v791, 96
    %v794 = vpop.permute.xlu0 %793
    %v795 = vsel %vm173, %v794, 0
    %797 = vmatprep.subr.mxu0 0.0
    %798 = vmatpush1.msra.mxu0 %v168
    %799 = vmatprep.subr.mxu0 0.0
    %800 = vmatpush1.msra.mxu0 %v169
    %801 = vmatprep.subr.mxu0 0.0
    %802 = vmatpush1.msra.mxu0 %v170
    %803 = vmatprep.subr.mxu0 0.0
    %804 = vmatpush1.msra.mxu0 %v171
    %805 = vmatprep.subr.mxu0 0.0
    %806 = vmatpush1.msra.mxu0 0.0
    %807 = vmatprep.subr.mxu0 0.0
    %808 = vmatpush1.msra.mxu0 0.0
    %809 = vmatprep.subr.mxu0 0.0
    %810 = vmatpush1.msra.mxu0 0.0
    %811 = vmatprep.subr.mxu0 0.0
    %812 = vmatpush1.msra.mxu0 0.0
    %813 = vmatprep.subr.mxu0 0.0
    %814 = vmatpush1.msra.mxu0 0.0
    %815 = vmatprep.subr.mxu0 0.0
    %816 = vmatpush1.msra.mxu0 0.0
    %817 = vmatprep.subr.mxu0 0.0
    %818 = vmatpush1.msra.mxu0 0.0
    %819 = vmatprep.subr.mxu0 0.0
    %820 = vmatpush1.msra.mxu0 0.0
    %821 = vmatprep.subr.mxu0 0.0
    %822 = vmatpush1.msra.mxu0 0.0
    %823 = vmatprep.subr.mxu0 0.0
    %824 = vmatpush1.msra.mxu0 0.0
    %825 = vmatprep.subr.mxu0 0.0
    %826 = vmatpush1.msra.mxu0 0.0
    %827 = vmatprep.subr.mxu0 0.0
    %828 = vmatpush1.msra.mxu0 0.0
    %829 = vmatprep.subr.mxu0 0.0
    %830 = vmatpush1.msra.mxu0 0.0
    %831 = vmatprep.subr.mxu0 0.0
    %832 = vmatpush1.msra.mxu0 0.0
    %833 = vmatprep.subr.mxu0 0.0
    %834 = vmatpush1.msra.mxu0 0.0
    %835 = vmatprep.subr.mxu0 0.0
    %836 = vmatpush1.msra.mxu0 0.0
    %837 = vmatprep.subr.mxu0 0.0
    %838 = vmatpush1.msra.mxu0 0.0
    %839 = vmatprep.subr.mxu0 0.0
    %840 = vmatpush1.msra.mxu0 0.0
    %841 = vmatprep.subr.mxu0 0.0
    %842 = vmatpush1.msra.mxu0 0.0
    %843 = vmatprep.subr.mxu0 0.0
    %844 = vmatpush1.msra.mxu0 0.0
    %845 = vmatprep.subr.mxu0 0.0
    %846 = vmatpush1.msra.mxu0 0.0
    %847 = vmatprep.subr.mxu0 0.0
    %848 = vmatpush1.msra.mxu0 0.0
    %849 = vmatprep.subr.mxu0 0.0
    %850 = vmatpush1.msra.mxu0 0.0
    %851 = vmatprep.subr.mxu0 0.0
    %852 = vmatpush1.msra.mxu0 0.0
    %853 = vmatprep.subr.mxu0 0.0
    %854 = vmatpush1.msra.mxu0 0.0
    %855 = vmatprep.subr.mxu0 0.0
    %856 = vmatpush1.msra.mxu0 0.0
    %857 = vmatprep.subr.mxu0 0.0
    %858 = vmatpush1.msra.mxu0 0.0
    %859 = vmatprep.subr.mxu0 0.0
    %860 = vmatpush1.msra.mxu0 0.0
    %861 = vmatprep.mubr.f32.mxu0 0.0
    %862 = vmatmul.mubr.f32.gmra.mrb[0].mxu0 %v795
    %v863 = vpop.f32.mrb[0].mxu0
    %v864 = vadd.f32 0.0, %v863
    %v865 = vpop.f32.mrb[0].mxu0
    %866 = vdwg.mxu0
    %v867 = vadd.f32 %v160, %v864
    %v868 = vxor.u32 %v867, 2147483648
    %v869 = vmul.f32 %v868, 1.442695
    %v870 = vpow.pop %v869
    %v871 = vadd.f32 %v870, 1.0
    %v872 = vrcp.pop %v871
    %v873 = vmul.f32 1.0, %v872
    %v874 = vadd.f32 %v864, %v260
    %876 = vrot.lane.b32.xlu0 %v874, 64
    %v877 = vpop.permute.xlu0 %876
    %v879 = vmul.f32 %v873, %v877
    %881 = vrot.lane.b32.xlu0 %v879, 64
    %v882 = vpop.permute.xlu0 %881
    %v884 = vadd.f32 %v160, %v882
    %v885 = vtanh.pop %v884
    %v886 = vsub.f32 1.0, %v873
    %888 = vrot.lane.b32.xlu0 %v885, 96
    %v889 = vpop.permute.xlu0 %888
    %v891 = vmul.f32 %v886, %v889
    %v892 = vmul.f32 %v873, %v791
    %v893 = vadd.f32 %v891, %v892
    %895 = vrot.lane.b32.xlu0 %v893, 96
    %v896 = vpop.permute.xlu0 %895
    %v897 = vsel %vm173, %v896, 0
    %899 = vmatprep.subr.mxu0 0.0
    %900 = vmatpush1.msra.mxu0 %v168
    %901 = vmatprep.subr.mxu0 0.0
    %902 = vmatpush1.msra.mxu0 %v169
    %903 = vmatprep.subr.mxu0 0.0
    %904 = vmatpush1.msra.mxu0 %v170
    %905 = vmatprep.subr.mxu0 0.0
    %906 = vmatpush1.msra.mxu0 %v171
    %907 = vmatprep.subr.mxu0 0.0
    %908 = vmatpush1.msra.mxu0 0.0
    %909 = vmatprep.subr.mxu0 0.0
    %910 = vmatpush1.msra.mxu0 0.0
    %911 = vmatprep.subr.mxu0 0.0
    %912 = vmatpush1.msra.mxu0 0.0
    %913 = vmatprep.subr.mxu0 0.0
    %914 = vmatpush1.msra.mxu0 0.0
    %915 = vmatprep.subr.mxu0 0.0
    %916 = vmatpush1.msra.mxu0 0.0
    %917 = vmatprep.subr.mxu0 0.0
    %918 = vmatpush1.msra.mxu0 0.0
    %919 = vmatprep.subr.mxu0 0.0
    %920 = vmatpush1.msra.mxu0 0.0
    %921 = vmatprep.subr.mxu0 0.0
    %922 = vmatpush1.msra.mxu0 0.0
    %923 = vmatprep.subr.mxu0 0.0
    %924 = vmatpush1.msra.mxu0 0.0
    %925 = vmatprep.subr.mxu0 0.0
    %926 = vmatpush1.msra.mxu0 0.0
    %927 = vmatprep.subr.mxu0 0.0
    %928 = vmatpush1.msra.mxu0 0.0
    %929 = vmatprep.subr.mxu0 0.0
    %930 = vmatpush1.msra.mxu0 0.0
    %931 = vmatprep.subr.mxu0 0.0
    %932 = vmatpush1.msra.mxu0 0.0
    %933 = vmatprep.subr.mxu0 0.0
    %934 = vmatpush1.msra.mxu0 0.0
    %935 = vmatprep.subr.mxu0 0.0
    %936 = vmatpush1.msra.mxu0 0.0
    %937 = vmatprep.subr.mxu0 0.0
    %938 = vmatpush1.msra.mxu0 0.0
    %939 = vmatprep.subr.mxu0 0.0
    %940 = vmatpush1.msra.mxu0 0.0
    %941 = vmatprep.subr.mxu0 0.0
    %942 = vmatpush1.msra.mxu0 0.0
    %943 = vmatprep.subr.mxu0 0.0
    %944 = vmatpush1.msra.mxu0 0.0
    %945 = vmatprep.subr.mxu0 0.0
    %946 = vmatpush1.msra.mxu0 0.0
    %947 = vmatprep.subr.mxu0 0.0
    %948 = vmatpush1.msra.mxu0 0.0
    %949 = vmatprep.subr.mxu0 0.0
    %950 = vmatpush1.msra.mxu0 0.0
    %951 = vmatprep.subr.mxu0 0.0
    %952 = vmatpush1.msra.mxu0 0.0
    %953 = vmatprep.subr.mxu0 0.0
    %954 = vmatpush1.msra.mxu0 0.0
    %955 = vmatprep.subr.mxu0 0.0
    %956 = vmatpush1.msra.mxu0 0.0
    %957 = vmatprep.subr.mxu0 0.0
    %958 = vmatpush1.msra.mxu0 0.0
    %959 = vmatprep.subr.mxu0 0.0
    %960 = vmatpush1.msra.mxu0 0.0
    %961 = vmatprep.subr.mxu0 0.0
    %962 = vmatpush1.msra.mxu0 0.0
    %963 = vmatprep.mubr.f32.mxu0 0.0
    %964 = vmatmul.mubr.f32.gmra.mrb[0].mxu0 %v897
    %v965 = vpop.f32.mrb[0].mxu0
    %v966 = vadd.f32 0.0, %v965
    %v967 = vpop.f32.mrb[0].mxu0
    %968 = vdwg.mxu0
    %v969 = vadd.f32 %v165, %v966
    %v970 = vxor.u32 %v969, 2147483648
    %v971 = vmul.f32 %v970, 1.442695
    %v972 = vpow.pop %v971
    %v973 = vadd.f32 %v972, 1.0
    %v974 = vrcp.pop %v973
    %v975 = vmul.f32 1.0, %v974
    %v976 = vadd.f32 %v966, %v260
    %978 = vrot.lane.b32.xlu0 %v976, 64
    %v979 = vpop.permute.xlu0 %978
    %v981 = vmul.f32 %v975, %v979
    %983 = vrot.lane.b32.xlu0 %v981, 64
    %v984 = vpop.permute.xlu0 %983
    %v986 = vadd.f32 %v165, %v984
    %v987 = vtanh.pop %v986
    %v988 = vsub.f32 1.0, %v975
    %990 = vrot.lane.b32.xlu0 %v987, 96
    %v991 = vpop.permute.xlu0 %990
    %v993 = vmul.f32 %v988, %v991
    %v994 = vmul.f32 %v975, %v893
    %v995 = vadd.f32 %v993, %v994
    %997 = vrot.lane.b32.xlu0 %v995, 96
    %v998 = vpop.permute.xlu0 %997
    %1000 = vst.msk [vmem:[#allocation2] sm:$0xff] %vm173, %v998
    // Predicated region
    $region22: #{tpu_custom_call.1} parent=1 // pred_check
      _
    $region23: #{tpu_custom_call.1} parent=1 // pred_check_branch
      %1002 = sbr.rel (0) target = $region25
    $region24: #{tpu_custom_call.1} parent=1 // pred_region
      %s1004 = ssub.s32 128, 128
      %1005 = vsyncadd [#allocation3], %s1004
      %s1007 = sshll.u32 [#allocation2], 4
      %s1008 = int_to_ptr.vmem [resolvable:$true] %s1007
      %1010 = dma.vmem_to_hbm [thread:$0]  %s1008, 128, %s5, [#allocation3]
    $region25: #{tpu_custom_call.1} parent=1 // pred_fallthru
      _
    // Predicated region
    $region26: #{tpu_custom_call.1} parent=1 // pred_check
      _
    $region27: #{tpu_custom_call.1} parent=1 // pred_check_branch
      %1012 = sbr.rel (0) target = $region29
    $region28: #{tpu_custom_call.1} parent=1 // pred_region
      %1013 = dma.done [#allocation3], 128
    $region29: #{tpu_custom_call.1} parent=1 // pred_fallthru
      _
    %1014 = vsyncpa [#allocation3], 1

</llo_original>
